<compile_context>
chip_gen: v7x
topology: tpu7x:2x2x1
jax: 0.10.0
libtpu: 0.0.40
codegen_flags: <defaults>
</compile_context>

<pallas_src>
import functools

import jax
import jax.numpy as jnp
from jax import lax
from jax.experimental import pallas as pl
from jax.experimental.pallas import tpu as pltpu


def _round_up(x, m):
    return ((x + m - 1) // m) * m


def _patch_embed_kernel(w_ref, b_ref, p_ref, o_ref):
    # w: (Npad, K), b: (Npad, 1), p: (TM, K)  ->  o: (Npad, TM)   (token-major tile)
    acc = lax.dot_general(
        w_ref[...], p_ref[...],
        dimension_numbers=(((1,), (1,)), ((), ())),   # W @ P^T: K contracted on both
        preferred_element_type=jnp.float32)
    # Bias add + final cast in f32 on the VPU (v5e has no bf16 VALU).
    o_ref[...] = (acc + b_ref[...]).astype(o_ref.dtype)


def _extract_patches(image, seg_h, seg_w, stride):
    """image: (B, C, H, W) NCHW -> (B*h_out*w_out, C*seg_h*seg_w), plus (h_out, w_out)."""
    B, C, H, W = image.shape
    h_out = (H - seg_h) // stride + 1
    w_out = (W - seg_w) // stride + 1

    if stride == seg_h == seg_w and H % seg_h == 0 and W % seg_w == 0:
        # Non-overlapping patches (the case the module asserts): pure reshape+transpose.
        p = image.reshape(B, C, h_out, seg_h, w_out, seg_w)
        p = jnp.transpose(p, (0, 2, 4, 1, 3, 5))          # (B, h_out, w_out, C, sh, sw)
        return p.reshape(B * h_out * w_out, C * seg_h * seg_w), h_out, w_out

    # Fallback (seg_h != seg_w with PyTorch's scalar stride=seg_w): gather im2col.
    # TODO(synk): for large images, move im2col into the kernel (BlockSpec the raw
    # NCHW image and rearrange in VMEM) to avoid materializing the patches buffer.
    row_idx = (jnp.arange(h_out) * stride)[:, None] + jnp.arange(seg_h)[None, :]
    col_idx = (jnp.arange(w_out) * stride)[:, None] + jnp.arange(seg_w)[None, :]
    p = image[:, :, row_idx[:, :, None, None], col_idx[None, None, :, :]]
    p = jnp.transpose(p, (0, 2, 4, 1, 3, 5))
    return p.reshape(B * h_out * w_out, C * seg_h * seg_w), h_out, w_out


@functools.partial(jax.jit,
                   static_argnames=("seg_h", "seg_w", "compute_dtype", "out_dtype"))
def tokenize_forward(image, conv_weight, conv_bias, seg_h, seg_w,
                     compute_dtype=jnp.bfloat16, out_dtype=jnp.float32):
    """Pallas equivalent of Tokenize.forward (the `label` arg is unused by the module)."""
    B, C, H, W = image.shape
    token_len = conv_weight.shape[0]
    stride = seg_w  # PyTorch scalar stride applies to both spatial dims.

    # im2col with the dtype cast fused in (patches buffer written once, narrow dtype).
    patches, h_out, w_out = _extract_patches(image.astype(compute_dtype),
                                             seg_h, seg_w, stride)     # (M, K)
    M, K = patches.shape
    N = token_len
    n_token = h_out * w_out

    in_bytes = jnp.dtype(compute_dtype).itemsize
    out_bytes = jnp.dtype(out_dtype).itemsize

    # Weight as (N, K) (K ordering C,sh,sw matches the patches); bias as (N, 1), f32.
    w_nk = conv_weight.reshape(N, K).astype(compute_dtype)
    b_n1 = conv_bias.reshape(N, 1).astype(jnp.float32)

    # N is the sublane dim of the token-major output: pad to the packed-sublane tile only.
    Npad = _round_up(N, 16)
    if Npad != N:
        w_nk = jnp.pad(w_nk, ((0, Npad - N), (0, 0)))
        b_n1 = jnp.pad(b_n1, ((0, Npad - N), (0, 0)))

    # ---- Tile size along M (lane dim of the output block) --------------------
    def _tiles_vmem(tm):
        # double-buffered patch + out tiles, resident (double-buffered) weight, bias
        return (2 * tm * K * in_bytes + 2 * Npad * tm * out_bytes
                + 2 * Npad * K * in_bytes + 2 * Npad * 4)

    if M <= 128:
        TM = M                                              # single full-extent block
    else:
        TM = min(512, _round_up(pl.cdiv(M, 2), 128))        # >= 2 grid steps when possible
        while TM > 128 and _tiles_vmem(TM) > 24 * 2**20:    # stay under v7x scoped VMEM
            TM -= 128
    grid = (pl.cdiv(M, TM),)                                # ragged last block is masked

    cost = pl.CostEstimate(
        flops=2 * M * K * Npad,
        bytes_accessed=in_bytes * (M * K + Npad * K) + 4 * Npad + out_bytes * Npad * M,
        transcendentals=0)
    vmem_limit = int(min(48 * 2**20, max(16 * 2**20, 2 * _tiles_vmem(TM))))

    out = pl.pallas_call(
        _patch_embed_kernel,
        out_shape=jax.ShapeDtypeStruct((Npad, M), out_dtype),
        grid=grid,
        in_specs=[
            pl.BlockSpec((Npad, K), lambda i: (0, 0)),   # weight: VMEM-resident
            pl.BlockSpec((Npad, 1), lambda i: (0, 0)),   # bias:   VMEM-resident
            pl.BlockSpec((TM, K), lambda i: (i, 0)),     # patch tiles stream over M
        ],
        out_specs=pl.BlockSpec((Npad, TM), lambda i: (0, i)),   # token-major output
        compiler_params=pltpu.CompilerParams(
            dimension_semantics=("parallel",),
            vmem_limit_bytes=vmem_limit),
        cost_estimate=cost,
    )(w_nk, b_n1, patches)

    # Epilogue: drop N padding, restore (B, token_len, n_token).  The permute only
    # swaps major dims (n_token stays minor) -> lane-friendly, near-memcpy.
    tok = out[:N, :].reshape(N, B, n_token)
    # TODO(synk): downstream consumers could take (token_len, B, n_token) directly
    # and skip this permute entirely.
    return jnp.transpose(tok, (1, 0, 2))


if __name__ == "__main__":
    # Small shapes consistent with the module: 16x16 image, 4 channels,
    # 4x4 patches, token_len 32.
    B, C, H, W = 2, 4, 16, 16
    seg_h, seg_w, token_len = 4, 4, 32

    key = jax.random.PRNGKey(0)
    k_img, k_w, k_b = jax.random.split(key, 3)
    image = jax.random.normal(k_img, (B, C, H, W), dtype=jnp.float32)
    label = jnp.zeros((B,), dtype=jnp.int32)  # unused by forward, as in PyTorch
    conv_weight = jax.random.normal(k_w, (token_len, C, seg_h, seg_w), dtype=jnp.float32) * 0.05
    conv_bias = jax.random.normal(k_b, (token_len,), dtype=jnp.float32) * 0.05

    # Reference: XLA conv (NCHW, stride seg_w in both dims) + flatten.
    ref = lax.conv_general_dilated(
        image, conv_weight, window_strides=(seg_w, seg_w), padding="VALID",
        dimension_numbers=("NCHW", "OIHW", "NCHW"),
    ) + conv_bias.reshape(1, token_len, 1, 1)
    ref = ref.reshape(B, token_len, -1)

    # Strict check in f32 compute.
    out_f32 = jax.block_until_ready(
        tokenize_forward(image, conv_weight, conv_bias, seg_h, seg_w,
                         compute_dtype=jnp.float32))
    assert out_f32.shape == (B, token_len, (H // seg_h) * (W // seg_w)), out_f32.shape
    assert jnp.allclose(out_f32, ref, atol=1e-4, rtol=1e-4), \
        float(jnp.max(jnp.abs(out_f32 - ref)))

    # Default bf16-fed path (f32 accumulation), looser tolerance.
    out_bf16 = jax.block_until_ready(
        tokenize_forward(image, conv_weight, conv_bias, seg_h, seg_w))
    assert out_bf16.shape == out_f32.shape
    assert jnp.allclose(out_bf16, ref, atol=3e-2, rtol=3e-2), \
        float(jnp.max(jnp.abs(out_bf16 - ref)))

    print("KERNEL_OK")
</pallas_src>

<mosaic_0001>
module attributes {stable_mosaic.version = 11 : i64} {
  func.func @_patch_embed_kernel(%arg0: i32, %arg1: memref<32x64xf32, #tpu.memory_space<vmem>>, %arg2: memref<32x1xf32, #tpu.memory_space<vmem>>, %arg3: memref<32x64xf32, #tpu.memory_space<vmem>>, %arg4: memref<32x32xf32, #tpu.memory_space<vmem>>) attributes {dimension_semantics = [#tpu.dimension_semantics<parallel>], iteration_bounds = array<i64: 1>, scalar_prefetch = 0 : i64, scratch_operands = 0 : i64, tpu.core_type = #tpu.core_type<tc>, window_params = [{pipeline_mode = #tpu.pipeline_mode<synchronous>, transform_indices = @transform_0, window_bounds = array<i64: 32, 64>}, {pipeline_mode = #tpu.pipeline_mode<synchronous>, transform_indices = @transform_1, window_bounds = array<i64: 32, 1>}, {transform_indices = @transform_2, window_bounds = array<i64: 32, 64>}, {transform_indices = @transform_3, window_bounds = array<i64: 32, 32>}]} {
    %c0 = arith.constant 0 : index
    %c0_0 = arith.constant 0 : index
    %0 = vector.load %arg1[%c0, %c0_0] : memref<32x64xf32, #tpu.memory_space<vmem>>, vector<32x64xf32>
    %c0_1 = arith.constant 0 : index
    %c0_2 = arith.constant 0 : index
    %1 = vector.load %arg3[%c0_1, %c0_2] : memref<32x64xf32, #tpu.memory_space<vmem>>, vector<32x64xf32>
    %cst = arith.constant dense<0.000000e+00> : vector<32x32xf32>
    %2 = tpu.matmul %0, %1, %cst {dimension_numbers = #tpu.dot_dimension_numbers<[1], [1], [0], [0], [0, 0, 1, 0], [], []>} : vector<32x64xf32>, vector<32x64xf32>, vector<32x32xf32> -> vector<32x32xf32>
    %c0_3 = arith.constant 0 : index
    %c0_4 = arith.constant 0 : index
    %3 = vector.load %arg2[%c0_3, %c0_4] : memref<32x1xf32, #tpu.memory_space<vmem>>, vector<32x1xf32>
    %4 = vector.broadcast %3 : vector<32x1xf32> to vector<32x32xf32>
    %5 = arith.addf %2, %4 : vector<32x32xf32>
    %c0_5 = arith.constant 0 : index
    %c0_6 = arith.constant 0 : index
    %6 = vector.load %arg4[%c0_5, %c0_6] : memref<32x32xf32, #tpu.memory_space<vmem>>, vector<32x32xf32>
    tpu.vector_store %arg4[%c0_5, %c0_6], %5 {strides = array<i32>} : memref<32x32xf32, #tpu.memory_space<vmem>>, vector<32x32xf32>,
    return
  }
  func.func @transform_0(%arg0: i32) -> (i32, i32) {
    %c0_i32 = arith.constant 0 : i32
    %c0_i32_0 = arith.constant 0 : i32
    %c0_i32_1 = arith.constant 0 : i32
    return %c0_i32, %c0_i32_0 : i32, i32
  }
  func.func @transform_1(%arg0: i32) -> (i32, i32) {
    %c0_i32 = arith.constant 0 : i32
    %c0_i32_0 = arith.constant 0 : i32
    %c0_i32_1 = arith.constant 0 : i32
    return %c0_i32, %c0_i32_0 : i32, i32
  }
  func.func @transform_2(%arg0: i32) -> (i32, i32) {
    %c0_i32 = arith.constant 0 : i32
    %c0_i32_0 = arith.constant 0 : i32
    return %arg0, %c0_i32 : i32, i32
  }
  func.func @transform_3(%arg0: i32) -> (i32, i32) {
    %c0_i32 = arith.constant 0 : i32
    %c0_i32_0 = arith.constant 0 : i32
    return %c0_i32, %arg0 : i32, i32
  }
}

</mosaic_0001>

<llo_original>
// kernel: tokenize_forward.1
$region0: #{tokenize_forward.1}
  #allocation0 [shape = 'u32[]', space=smem, size = 0x4, offset = 0x4, fixed_abs, tag = 'smem constant byte address 0x4 - core index']
  #allocation1 [shape = 'u32[144,128]{1,0:T(1,128)}', space=vmem, size = 0x12000, scoped, tag = 'internal scratch']
  %s0 = inlined_call_operand.vmem [shape: f32[32,64], index: 0, kind: input, shape index: {}]
  %s1 = inlined_call_operand.vmem [shape: f32[32,1], index: 1, kind: input, shape index: {}]
  %s2 = inlined_call_operand.vmem [shape: f32[32,64], index: 2, kind: input, shape index: {}]
  %s3 = inlined_call_operand.vmem [shape: f32[32,32], index: 3, kind: output, shape index: {}]
  %s4 = sld [smem:[#allocation0]]
  $region22: #{tokenize_forward.1} parent=0
    _
  %s6 = ssub.s32 1, %s4
  %s7 = scalar_select 0, %s6, %s4
  // Predicated region
  $region2: #{tokenize_forward.1} parent=0 // pred_check
    _
  $region3: #{tokenize_forward.1} parent=0 // pred_check_branch
    %9 = sbr.rel (0) target = $region5
  $region4: #{tokenize_forward.1} parent=0 // pred_region
    _
  $region5: #{tokenize_forward.1} parent=0 // pred_fallthru
    _
  // Predicated region
  $region6: #{tokenize_forward.1} parent=0 // pred_check
    _
  $region7: #{tokenize_forward.1} parent=0 // pred_check_branch
    %11 = sbr.rel (0) target = $region9
  $region8: #{tokenize_forward.1} parent=0 // pred_region
    _
  $region9: #{tokenize_forward.1} parent=0 // pred_fallthru
    _
  // Predicated region
  $region10: #{tokenize_forward.1} parent=0 // pred_check
    _
  $region11: #{tokenize_forward.1} parent=0 // pred_check_branch
    %13 = sbr.rel (0) target = $region13
  $region12: #{tokenize_forward.1} parent=0 // pred_region
    _
  $region13: #{tokenize_forward.1} parent=0 // pred_fallthru
    _
  %v14 = vld [vmem:[%s0] sm:$0xff]
  %v15 = vld [vmem:[%s0 + $0x8] sm:$0xff]
  %v16 = vld [vmem:[%s0 + $0x10] sm:$0xff]
  %v17 = vld [vmem:[%s0 + $0x18] sm:$0xff]
  %v18 = vld [vmem:[%s2] sm:$0xff]
  %v19 = vld [vmem:[%s2 + $0x8] sm:$0xff]
  %v20 = vld [vmem:[%s2 + $0x10] sm:$0xff]
  %v21 = vld [vmem:[%s2 + $0x18] sm:$0xff]
  %v22 = vld [vmem:[%s1] sm:$0xff]
  %v23 = vld [vmem:[%s1 + $0x8] sm:$0xff]
  %v24 = vld [vmem:[%s1 + $0x10] sm:$0xff]
  %v25 = vld [vmem:[%s1 + $0x18] sm:$0xff]
  %27 = vset.pattern.permute.xlu0 0
  %28 = vperm.xlu0 %27, %v22
  %v29 = vpop.permute.xlu0 %28
  %32 = vset.pattern.permute.xlu0 0
  %33 = vperm.xlu0 %32, %v23
  %v34 = vpop.permute.xlu0 %33
  %37 = vset.pattern.permute.xlu0 0
  %38 = vperm.xlu0 %37, %v24
  %v39 = vpop.permute.xlu0 %38
  %42 = vset.pattern.permute.xlu0 0
  %43 = vperm.xlu0 %42, %v25
  %v44 = vpop.permute.xlu0 %43
  %vm46 = vcmask 523264
  %v48 = vsel %vm46, %v14, 0
  %v51 = vsel %vm46, %v15, 0
  %v54 = vsel %vm46, %v16, 0
  %v57 = vsel %vm46, %v17, 0
  %v60 = vsel %vm46, %v18, 0
  %v63 = vsel %vm46, %v19, 0
  %v66 = vsel %vm46, %v20, 0
  %v69 = vsel %vm46, %v21, 0
  %71 = vmatprep.subr.mxu0 0.0
  %72 = vmatpush1.xpose.msra.mxu0 %v60
  %73 = vmatprep.subr.mxu0 0.0
  %74 = vmatpush1.xpose.msra.mxu0 %v63
  %75 = vmatprep.subr.mxu0 0.0
  %76 = vmatpush1.xpose.msra.mxu0 %v66
  %77 = vmatprep.subr.mxu0 0.0
  %78 = vmatpush1.xpose.msra.mxu0 %v69
  %79 = vmatprep.subr.mxu0 0.0
  %80 = vmatpush1.xpose.msra.mxu0 0.0
  %81 = vmatprep.subr.mxu0 0.0
  %82 = vmatpush1.xpose.msra.mxu0 0.0
  %83 = vmatprep.subr.mxu0 0.0
  %84 = vmatpush1.xpose.msra.mxu0 0.0
  %85 = vmatprep.subr.mxu0 0.0
  %86 = vmatpush1.xpose.msra.mxu0 0.0
  %87 = vmatprep.subr.mxu0 0.0
  %88 = vmatpush1.xpose.msra.mxu0 0.0
  %89 = vmatprep.subr.mxu0 0.0
  %90 = vmatpush1.xpose.msra.mxu0 0.0
  %91 = vmatprep.subr.mxu0 0.0
  %92 = vmatpush1.xpose.msra.mxu0 0.0
  %93 = vmatprep.subr.mxu0 0.0
  %94 = vmatpush1.xpose.msra.mxu0 0.0
  %95 = vmatprep.subr.mxu0 0.0
  %96 = vmatpush1.xpose.msra.mxu0 0.0
  %97 = vmatprep.subr.mxu0 0.0
  %98 = vmatpush1.xpose.msra.mxu0 0.0
  %99 = vmatprep.subr.mxu0 0.0
  %100 = vmatpush1.xpose.msra.mxu0 0.0
  %101 = vmatprep.subr.mxu0 0.0
  %102 = vmatpush1.xpose.msra.mxu0 0.0
  %103 = vmatprep.subr.mxu0 0.0
  %104 = vmatpush1.xpose.msra.mxu0 0.0
  %105 = vmatprep.subr.mxu0 0.0
  %106 = vmatpush1.xpose.msra.mxu0 0.0
  %107 = vmatprep.subr.mxu0 0.0
  %108 = vmatpush1.xpose.msra.mxu0 0.0
  %109 = vmatprep.subr.mxu0 0.0
  %110 = vmatpush1.xpose.msra.mxu0 0.0
  %111 = vmatprep.subr.mxu0 0.0
  %112 = vmatpush1.xpose.msra.mxu0 0.0
  %113 = vmatprep.subr.mxu0 0.0
  %114 = vmatpush1.xpose.msra.mxu0 0.0
  %115 = vmatprep.subr.mxu0 0.0
  %116 = vmatpush1.xpose.msra.mxu0 0.0
  %117 = vmatprep.subr.mxu0 0.0
  %118 = vmatpush1.xpose.msra.mxu0 0.0
  %119 = vmatprep.subr.mxu0 0.0
  %120 = vmatpush1.xpose.msra.mxu0 0.0
  %121 = vmatprep.subr.mxu0 0.0
  %122 = vmatpush1.xpose.msra.mxu0 0.0
  %123 = vmatprep.subr.mxu0 0.0
  %124 = vmatpush1.xpose.msra.mxu0 0.0
  %125 = vmatprep.subr.mxu0 0.0
  %126 = vmatpush1.xpose.msra.mxu0 0.0
  %127 = vmatprep.subr.mxu0 0.0
  %128 = vmatpush1.xpose.msra.mxu0 0.0
  %129 = vmatprep.subr.mxu0 0.0
  %130 = vmatpush1.xpose.msra.mxu0 0.0
  %131 = vmatprep.subr.mxu0 0.0
  %132 = vmatpush1.xpose.msra.mxu0 0.0
  %133 = vmatprep.subr.mxu0 0.0
  %134 = vmatpush1.xpose.msra.mxu0 0.0
  %135 = vmatprep.mubr.f32.mxu0 0.0
  %136 = vmatmul.mubr.f32.gmra.mrb[0].mxu0 %v48
  %v137 = vpop.f32.mrb[0].mxu0
  %v138 = vadd.f32 %v29, %v137
  %v139 = vpop.f32.mrb[0].mxu0
  %140 = vmatprep.mubr.f32.mxu0 0.0
  %141 = vmatmul.mubr.f32.gmra.mrb[0].mxu0 %v51
  %v142 = vpop.f32.mrb[0].mxu0
  %v143 = vadd.f32 %v34, %v142
  %v144 = vpop.f32.mrb[0].mxu0
  %145 = vmatprep.mubr.f32.mxu0 0.0
  %146 = vmatmul.mubr.f32.gmra.mrb[0].mxu0 %v54
  %v147 = vpop.f32.mrb[0].mxu0
  %v148 = vadd.f32 %v39, %v147
  %v149 = vpop.f32.mrb[0].mxu0
  %150 = vmatprep.mubr.f32.mxu0 0.0
  %151 = vmatmul.mubr.f32.gmra.mrb[0].mxu0 %v57
  %v152 = vpop.f32.mrb[0].mxu0
  %v153 = vadd.f32 %v44, %v152
  %v154 = vpop.f32.mrb[0].mxu0
  %155 = vdwg.mxu0
  %vm156 = vcmask 261120
  %157 = vst.msk [vmem:[%s3] sm:$0xff] %vm156, %v138
  %158 = vst.msk [vmem:[%s3 + $0x8] sm:$0xff] %vm156, %v143
  %159 = vst.msk [vmem:[%s3 + $0x10] sm:$0xff] %vm156, %v148
  %160 = vst.msk [vmem:[%s3 + $0x18] sm:$0xff] %vm156, %v153
  // Predicated region
  $region14: #{tokenize_forward.1} parent=0 // pred_check
    _
  $region15: #{tokenize_forward.1} parent=0 // pred_check_branch
    %162 = sbr.rel (0) target = $region17
  $region16: #{tokenize_forward.1} parent=0 // pred_region
    _
  $region17: #{tokenize_forward.1} parent=0 // pred_fallthru
    _
  // Predicated region
  $region18: #{tokenize_forward.1} parent=0 // pred_check
    _
  $region19: #{tokenize_forward.1} parent=0 // pred_check_branch
    %164 = sbr.rel (0) target = $region21
  $region20: #{tokenize_forward.1} parent=0 // pred_region
    _
  $region21: #{tokenize_forward.1} parent=0 // pred_fallthru
    _

</llo_original>
